<compile_context>
chip_gen: v7x
topology: tpu7x:2x2x1
jax: 0.10.0
libtpu: 0.0.40
codegen_flags: <defaults>
</compile_context>

<pallas_src>
import jax
import jax.numpy as jnp
from jax.experimental import pallas as pl
from jax.experimental.pallas import tpu as pltpu


def _round_up(v: int, m: int) -> int:
    return (v + m - 1) // m * m


def _project_kernel(x_ref, dis_ref, w_ref, h_ref):
    """h = (x @ W) * deg^{-1/2}  for one tile of source nodes (weights resident)."""
    h = jnp.dot(x_ref[...], w_ref[...], preferred_element_type=jnp.float32)
    h_ref[...] = (h * dis_ref[...]).astype(h_ref.dtype)


def _aggregate_kernel(adj_ref, h_ref, dis_ref, b_ref, o_ref, acc_ref):
    """out = deg^{-1/2} * (A_hat @ h_scaled) + b, accumulated over source-node tiles."""
    k = pl.program_id(1)

    @pl.when(k == 0)
    def _():
        acc_ref[...] = jnp.zeros_like(acc_ref)

    # A_hat tile is consumed in its native layout (no .T / XLU transpose needed).
    acc_ref[...] += jnp.dot(adj_ref[...], h_ref[...],
                            preferred_element_type=jnp.float32)

    @pl.when(k == pl.num_programs(1) - 1)
    def _():
        o_ref[...] = (acc_ref[...] * dis_ref[...] + b_ref[...]).astype(o_ref.dtype)


def gcn_layer(x, edge_index, weight, bias, *, node_tile: int = 128):
    """GraphConvLayer.forward(x, edge_index) == GCNConv(in, out)(x, edge_index).

    x:          (N, D_in)  float32 node features
    edge_index: (2, E)     int32; row 0 = source nodes, row 1 = target nodes
    weight:     (D_in, D_out)  (transposed PyTorch GCNConv.lin.weight)
    bias:       (D_out,)
    returns:    (N, D_out)
    """
    N, D_in = x.shape
    D_out = weight.shape[1]

    # --- edge_index -> dense adjacency with self loops + symmetric normalization ---
    # TODO(synk): the COO scatter (edge_index -> dense A_hat / degrees) stays in the JAX
    # wrapper; a data-dependent scatter has no clean dense Pallas equivalent.
    src, dst = edge_index[0], edge_index[1]
    adj = jnp.zeros((N, N), jnp.float32).at[dst, src].add(1.0)
    adj = adj + jnp.eye(N, dtype=jnp.float32)                  # add self loops
    deg = jnp.sum(adj, axis=1, keepdims=True)                  # (N, 1) in-degree + 1
    dis = jnp.where(deg > 0, 1.0 / jnp.sqrt(deg), 0.0)         # deg^{-1/2}, (N, 1)

    # --- pad to lane/sublane-dense shapes (multiples of 128) ------------------------
    n_p = _round_up(max(N, node_tile), node_tile)
    d_in_p = _round_up(D_in, 128)
    d_out_p = _round_up(D_out, 128)

    adj_p = jnp.zeros((n_p, n_p), jnp.float32).at[:N, :N].set(adj)
    x_p = jnp.zeros((n_p, d_in_p), jnp.float32).at[:N, :D_in].set(x.astype(jnp.float32))
    w_p = jnp.zeros((d_in_p, d_out_p), jnp.float32).at[:D_in, :D_out].set(
        weight.astype(jnp.float32))
    b_p = jnp.zeros((1, d_out_p), jnp.float32).at[0, :D_out].set(bias.astype(jnp.float32))
    dis_p = jnp.zeros((n_p, 1), jnp.float32).at[:N].set(dis)

    n_tiles = n_p // node_tile

    # --- kernel 1: projection + source-side normalization (parallel over node tiles) ---
    h_scaled = pl.pallas_call(
        _project_kernel,
        out_shape=jax.ShapeDtypeStruct((n_p, d_out_p), jnp.float32),
        grid_spec=pltpu.PrefetchScalarGridSpec(
            num_scalar_prefetch=0,
            grid=(n_tiles,),
            in_specs=[
                pl.BlockSpec((node_tile, d_in_p), lambda i: (i, 0)),   # x tile
                pl.BlockSpec((node_tile, 1), lambda i: (i, 0)),        # deg^{-1/2} (src)
                pl.BlockSpec((d_in_p, d_out_p), lambda i: (0, 0)),     # W (resident)
            ],
            out_specs=pl.BlockSpec((node_tile, d_out_p), lambda i: (i, 0)),
        ),
        compiler_params=pltpu.CompilerParams(
            dimension_semantics=("parallel",),
        ),
    )(x_p, dis_p, w_p)

    # --- kernel 2: tiled aggregation  out = D^{-1/2} A_hat H + b -----------------------
    # grid = (dst tiles [parallel], src tiles [arbitrary, reduction last]); f32 VMEM
    # accumulator; dst-side scaling + bias applied on the last reduction step only.
    out_p = pl.pallas_call(
        _aggregate_kernel,
        out_shape=jax.ShapeDtypeStruct((n_p, d_out_p), jnp.float32),
        grid_spec=pltpu.PrefetchScalarGridSpec(
            num_scalar_prefetch=0,
            grid=(n_tiles, n_tiles),
            in_specs=[
                pl.BlockSpec((node_tile, node_tile), lambda i, k: (i, k)),  # A_hat tile
                pl.BlockSpec((node_tile, d_out_p), lambda i, k: (k, 0)),    # H tile
                pl.BlockSpec((node_tile, 1), lambda i, k: (i, 0)),          # deg^{-1/2} (dst)
                pl.BlockSpec((1, d_out_p), lambda i, k: (0, 0)),            # bias (resident)
            ],
            out_specs=pl.BlockSpec((node_tile, d_out_p), lambda i, k: (i, 0)),
            scratch_shapes=[pltpu.VMEM((node_tile, d_out_p), jnp.float32)],
        ),
        compiler_params=pltpu.CompilerParams(
            dimension_semantics=("parallel", "arbitrary"),
        ),
    )(adj_p, h_scaled, dis_p, b_p)

    return out_p[:N, :D_out]


def reference_gcn(x, edge_index, weight, bias):
    """Pure-JAX GCNConv reference (scatter-style message passing, PyG semantics)."""
    N = x.shape[0]
    src, dst = edge_index[0], edge_index[1]
    loop = jnp.arange(N, dtype=src.dtype)
    src = jnp.concatenate([src, loop])
    dst = jnp.concatenate([dst, loop])
    deg = jnp.zeros((N,), jnp.float32).at[dst].add(1.0)
    dis = jnp.where(deg > 0, 1.0 / jnp.sqrt(deg), 0.0)
    norm = dis[src] * dis[dst]
    h = x @ weight
    out = jnp.zeros((N, weight.shape[1]), jnp.float32).at[dst].add(h[src] * norm[:, None])
    return out + bias[None, :]


if __name__ == "__main__":
    N, E, IN_C, OUT_C = 16, 48, 32, 32

    key = jax.random.PRNGKey(0)
    kx, ke1, ke2, kw, kb = jax.random.split(key, 5)

    x = jax.random.normal(kx, (N, IN_C), dtype=jnp.float32)
    src = jax.random.randint(ke1, (E,), 0, N, dtype=jnp.int32)
    dst = jax.random.randint(ke2, (E,), 0, N, dtype=jnp.int32)
    dst = jnp.where(src == dst, (dst + 1) % N, dst)   # no explicit self loops (GCNConv adds its own)
    edge_index = jnp.stack([src, dst], axis=0)

    # Deterministic parameter init (mimics GCNConv's linear weight + bias parameters).
    bound = 1.0 / (IN_C ** 0.5)
    weight = jax.random.uniform(kw, (IN_C, OUT_C), jnp.float32, -bound, bound)
    bias = jax.random.uniform(kb, (OUT_C,), jnp.float32, -bound, bound)

    out = gcn_layer(x, edge_index, weight, bias)
    out = jax.block_until_ready(out)

    ref = reference_gcn(x, edge_index, weight, bias)
    assert out.shape == (N, OUT_C)
    assert jnp.allclose(out, ref, atol=1e-4, rtol=1e-4), float(jnp.max(jnp.abs(out - ref)))

    print("KERNEL_OK")
</pallas_src>

<mosaic_0001>
module attributes {stable_mosaic.version = 11 : i64} {
  func.func @_project_kernel(%arg0: i32, %arg1: memref<128x128xf32, #tpu.memory_space<vmem>>, %arg2: memref<128x1xf32, #tpu.memory_space<vmem>>, %arg3: memref<128x128xf32, #tpu.memory_space<vmem>>, %arg4: memref<128x128xf32, #tpu.memory_space<vmem>>) attributes {dimension_semantics = [#tpu.dimension_semantics<parallel>], iteration_bounds = array<i64: 1>, scalar_prefetch = 0 : i64, scratch_operands = 0 : i64, tpu.core_type = #tpu.core_type<tc>, window_params = [{transform_indices = @transform_0, window_bounds = array<i64: 128, 128>}, {transform_indices = @transform_1, window_bounds = array<i64: 128, 1>}, {pipeline_mode = #tpu.pipeline_mode<synchronous>, transform_indices = @transform_2, window_bounds = array<i64: 128, 128>}, {transform_indices = @transform_3, window_bounds = array<i64: 128, 128>}]} {
    %c0 = arith.constant 0 : index
    %c0_0 = arith.constant 0 : index
    %0 = vector.load %arg1[%c0, %c0_0] : memref<128x128xf32, #tpu.memory_space<vmem>>, vector<128x128xf32>
    %c0_1 = arith.constant 0 : index
    %c0_2 = arith.constant 0 : index
    %1 = vector.load %arg3[%c0_1, %c0_2] : memref<128x128xf32, #tpu.memory_space<vmem>>, vector<128x128xf32>
    %cst = arith.constant dense<0.000000e+00> : vector<128x128xf32>
    %2 = tpu.matmul %0, %1, %cst {dimension_numbers = #tpu.dot_dimension_numbers<[1], [0], [0], [1], [0, 0, 1, 1], [], []>} : vector<128x128xf32>, vector<128x128xf32>, vector<128x128xf32> -> vector<128x128xf32>
    %c0_3 = arith.constant 0 : index
    %c0_4 = arith.constant 0 : index
    %3 = vector.load %arg2[%c0_3, %c0_4] : memref<128x1xf32, #tpu.memory_space<vmem>>, vector<128x1xf32>
    %4 = vector.broadcast %3 : vector<128x1xf32> to vector<128x128xf32>
    %5 = arith.mulf %2, %4 : vector<128x128xf32>
    %c0_5 = arith.constant 0 : index
    %c0_6 = arith.constant 0 : index
    %6 = vector.load %arg4[%c0_5, %c0_6] : memref<128x128xf32, #tpu.memory_space<vmem>>, vector<128x128xf32>
    tpu.vector_store %arg4[%c0_5, %c0_6], %5 {strides = array<i32>} : memref<128x128xf32, #tpu.memory_space<vmem>>, vector<128x128xf32>,
    return
  }
  func.func @transform_0(%arg0: i32) -> (i32, i32) {
    %c0_i32 = arith.constant 0 : i32
    %c0_i32_0 = arith.constant 0 : i32
    return %arg0, %c0_i32 : i32, i32
  }
  func.func @transform_1(%arg0: i32) -> (i32, i32) {
    %c0_i32 = arith.constant 0 : i32
    %c0_i32_0 = arith.constant 0 : i32
    return %arg0, %c0_i32 : i32, i32
  }
  func.func @transform_2(%arg0: i32) -> (i32, i32) {
    %c0_i32 = arith.constant 0 : i32
    %c0_i32_0 = arith.constant 0 : i32
    %c0_i32_1 = arith.constant 0 : i32
    return %c0_i32, %c0_i32_0 : i32, i32
  }
  func.func @transform_3(%arg0: i32) -> (i32, i32) {
    %c0_i32 = arith.constant 0 : i32
    %c0_i32_0 = arith.constant 0 : i32
    return %arg0, %c0_i32 : i32, i32
  }
}

</mosaic_0001>

<llo_original>
// kernel: tpu_custom_call.1
$region0: #{tpu_custom_call.1}
  #allocation0 [shape = 'u32[]', space=smem, size = 0x4, offset = 0x4, fixed_abs, tag = 'smem constant byte address 0x4 - core index']
  #allocation1 [shape = 'u32[144,128]{1,0:T(1,128)}', space=vmem, size = 0x12000, scoped, tag = 'internal scratch']
  %s0 = inlined_call_operand.vmem [shape: f32[128,128], index: 0, kind: input, shape index: {}]
  %s1 = inlined_call_operand.vmem [shape: f32[128,1], index: 1, kind: input, shape index: {}]
  %s2 = inlined_call_operand.hbm [shape: f32[128,128], index: 2, kind: input, shape index: {}]
  %s3 = inlined_call_operand.hbm [shape: f32[128,128], index: 3, kind: output, shape index: {}]
  %s4 = sld [smem:[#allocation0]]
  $region26: #{tpu_custom_call.1} parent=0
    _
  %s6 = ssub.s32 1, %s4
  %s7 = scalar_select 0, %s6, %s4
  $region1: #{tpu_custom_call.1} parent=0
    #allocation2 [shape = 'u8[65536]{0}', space=vmem, size = 0x10000, scoped, tag = 'input window, operand 2, single buffered']
    #allocation3 [shape = 's32[1]{0}', space=sflag, size = 0x4, scoped, tag = 'scoped memory for tpu_custom_call.1']
    #allocation4 [shape = 's32[1]{0}', space=sflag, size = 0x4, scoped, tag = 'scoped memory for tpu_custom_call.1']
    #allocation5 [shape = 'u8[65536]{0}', space=vmem, size = 0x10000, scoped, tag = 'output window, operand 0, single buffered']
    %8 = vsyncpa [#allocation3], 0
    %9 = vsyncpa [#allocation4], 0
    // Predicated region
    $region2: #{tpu_custom_call.1} parent=1 // pred_check
      _
    $region3: #{tpu_custom_call.1} parent=1 // pred_check_branch
      %11 = sbr.rel (0) target = $region5
    $region4: #{tpu_custom_call.1} parent=1 // pred_region
      _
    $region5: #{tpu_custom_call.1} parent=1 // pred_fallthru
      _
    // Predicated region
    $region6: #{tpu_custom_call.1} parent=1 // pred_check
      _
    $region7: #{tpu_custom_call.1} parent=1 // pred_check_branch
      %13 = sbr.rel (0) target = $region9
    $region8: #{tpu_custom_call.1} parent=1 // pred_region
      _
    $region9: #{tpu_custom_call.1} parent=1 // pred_fallthru
      _
    // Predicated region
    $region10: #{tpu_custom_call.1} parent=1 // pred_check
      _
    $region11: #{tpu_custom_call.1} parent=1 // pred_check_branch
      %15 = sbr.rel (0) target = $region13
    $region12: #{tpu_custom_call.1} parent=1 // pred_region
      %s17 = ssub.s32 2048, 2048
      %18 = vsyncadd [#allocation3], %s17
      %s19 = sshll.u32 [#allocation2], 4
      %s20 = int_to_ptr.vmem [resolvable:$true] %s19
      %25 = dma.hbm_to_vmem [thread:$0]  %s2, 2048, %s20, [#allocation3], 128, 128, 8
    $region13: #{tpu_custom_call.1} parent=1 // pred_fallthru
      _
    // Predicated region
    $region14: #{tpu_custom_call.1} parent=1 // pred_check
      _
    $region15: #{tpu_custom_call.1} parent=1 // pred_check_branch
      %27 = sbr.rel (0) target = $region17
    $region16: #{tpu_custom_call.1} parent=1 // pred_region
      %28 = dma.done [#allocation3], 2048
    $region17: #{tpu_custom_call.1} parent=1 // pred_fallthru
      _
    %v29 = vld [vmem:[%s0] sm:$0xff]
    %v30 = vld [vmem:[%s0 + $0x8] sm:$0xff]
    %v31 = vld [vmem:[%s0 + $0x10] sm:$0xff]
    %v32 = vld [vmem:[%s0 + $0x18] sm:$0xff]
    %v33 = vld [vmem:[%s0 + $0x20] sm:$0xff]
    %v34 = vld [vmem:[%s0 + $0x28] sm:$0xff]
    %v35 = vld [vmem:[%s0 + $0x30] sm:$0xff]
    %v36 = vld [vmem:[%s0 + $0x38] sm:$0xff]
    %v37 = vld [vmem:[%s0 + $0x40] sm:$0xff]
    %v38 = vld [vmem:[%s0 + $0x48] sm:$0xff]
    %v39 = vld [vmem:[%s0 + $0x50] sm:$0xff]
    %v40 = vld [vmem:[%s0 + $0x58] sm:$0xff]
    %v41 = vld [vmem:[%s0 + $0x60] sm:$0xff]
    %v42 = vld [vmem:[%s0 + $0x68] sm:$0xff]
    %v43 = vld [vmem:[%s0 + $0x70] sm:$0xff]
    %v44 = vld [vmem:[%s0 + $0x78] sm:$0xff]
    %v45 = vld [vmem:[#allocation2] sm:$0xff]
    %v46 = vld [vmem:[#allocation2 + $0x8] sm:$0xff]
    %v47 = vld [vmem:[#allocation2 + $0x10] sm:$0xff]
    %v48 = vld [vmem:[#allocation2 + $0x18] sm:$0xff]
    %v49 = vld [vmem:[#allocation2 + $0x20] sm:$0xff]
    %v50 = vld [vmem:[#allocation2 + $0x28] sm:$0xff]
    %v51 = vld [vmem:[#allocation2 + $0x30] sm:$0xff]
    %v52 = vld [vmem:[#allocation2 + $0x38] sm:$0xff]
    %v53 = vld [vmem:[#allocation2 + $0x40] sm:$0xff]
    %v54 = vld [vmem:[#allocation2 + $0x48] sm:$0xff]
    %v55 = vld [vmem:[#allocation2 + $0x50] sm:$0xff]
    %v56 = vld [vmem:[#allocation2 + $0x58] sm:$0xff]
    %v57 = vld [vmem:[#allocation2 + $0x60] sm:$0xff]
    %v58 = vld [vmem:[#allocation2 + $0x68] sm:$0xff]
    %v59 = vld [vmem:[#allocation2 + $0x70] sm:$0xff]
    %v60 = vld [vmem:[#allocation2 + $0x78] sm:$0xff]
    %61 = vmatprep.subr.mxu0 0.0
    %62 = vmatpush1.msra.mxu0 %v45
    %63 = vmatprep.subr.mxu0 0.0
    %64 = vmatpush1.msra.mxu0 %v46
    %65 = vmatprep.subr.mxu0 0.0
    %66 = vmatpush1.msra.mxu0 %v47
    %67 = vmatprep.subr.mxu0 0.0
    %68 = vmatpush1.msra.mxu0 %v48
    %69 = vmatprep.subr.mxu0 0.0
    %70 = vmatpush1.msra.mxu0 %v49
    %71 = vmatprep.subr.mxu0 0.0
    %72 = vmatpush1.msra.mxu0 %v50
    %73 = vmatprep.subr.mxu0 0.0
    %74 = vmatpush1.msra.mxu0 %v51
    %75 = vmatprep.subr.mxu0 0.0
    %76 = vmatpush1.msra.mxu0 %v52
    %77 = vmatprep.subr.mxu0 0.0
    %78 = vmatpush1.msra.mxu0 %v53
    %79 = vmatprep.subr.mxu0 0.0
    %80 = vmatpush1.msra.mxu0 %v54
    %81 = vmatprep.subr.mxu0 0.0
    %82 = vmatpush1.msra.mxu0 %v55
    %83 = vmatprep.subr.mxu0 0.0
    %84 = vmatpush1.msra.mxu0 %v56
    %85 = vmatprep.subr.mxu0 0.0
    %86 = vmatpush1.msra.mxu0 %v57
    %87 = vmatprep.subr.mxu0 0.0
    %88 = vmatpush1.msra.mxu0 %v58
    %89 = vmatprep.subr.mxu0 0.0
    %90 = vmatpush1.msra.mxu0 %v59
    %91 = vmatprep.subr.mxu0 0.0
    %92 = vmatpush1.msra.mxu0 %v60
    %93 = vmatprep.subr.mxu0 0.0
    %94 = vmatpush1.msra.mxu0 0.0
    %95 = vmatprep.subr.mxu0 0.0
    %96 = vmatpush1.msra.mxu0 0.0
    %97 = vmatprep.subr.mxu0 0.0
    %98 = vmatpush1.msra.mxu0 0.0
    %99 = vmatprep.subr.mxu0 0.0
    %100 = vmatpush1.msra.mxu0 0.0
    %101 = vmatprep.subr.mxu0 0.0
    %102 = vmatpush1.msra.mxu0 0.0
    %103 = vmatprep.subr.mxu0 0.0
    %104 = vmatpush1.msra.mxu0 0.0
    %105 = vmatprep.subr.mxu0 0.0
    %106 = vmatpush1.msra.mxu0 0.0
    %107 = vmatprep.subr.mxu0 0.0
    %108 = vmatpush1.msra.mxu0 0.0
    %109 = vmatprep.subr.mxu0 0.0
    %110 = vmatpush1.msra.mxu0 0.0
    %111 = vmatprep.subr.mxu0 0.0
    %112 = vmatpush1.msra.mxu0 0.0
    %113 = vmatprep.subr.mxu0 0.0
    %114 = vmatpush1.msra.mxu0 0.0
    %115 = vmatprep.subr.mxu0 0.0
    %116 = vmatpush1.msra.mxu0 0.0
    %117 = vmatprep.subr.mxu0 0.0
    %118 = vmatpush1.msra.mxu0 0.0
    %119 = vmatprep.subr.mxu0 0.0
    %120 = vmatpush1.msra.mxu0 0.0
    %121 = vmatprep.subr.mxu0 0.0
    %122 = vmatpush1.msra.mxu0 0.0
    %123 = vmatprep.subr.mxu0 0.0
    %124 = vmatpush1.msra.mxu0 0.0
    %125 = vmatprep.mubr.f32.mxu0 0.0
    %126 = vmatmul.mubr.f32.gmra.mrb[0].mxu0 %v29
    %v127 = vpop.f32.mrb[0].mxu0
    %v128 = vadd.f32 0.0, %v127
    %v129 = vpop.f32.mrb[0].mxu0
    %130 = vmatprep.mubr.f32.mxu0 0.0
    %131 = vmatmul.mubr.f32.gmra.mrb[0].mxu0 %v30
    %v132 = vpop.f32.mrb[0].mxu0
    %v133 = vadd.f32 0.0, %v132
    %v134 = vpop.f32.mrb[0].mxu0
    %135 = vmatprep.mubr.f32.mxu0 0.0
    %136 = vmatmul.mubr.f32.gmra.mrb[0].mxu0 %v31
    %v137 = vpop.f32.mrb[0].mxu0
    %v138 = vadd.f32 0.0, %v137
    %v139 = vpop.f32.mrb[0].mxu0
    %140 = vmatprep.mubr.f32.mxu0 0.0
    %141 = vmatmul.mubr.f32.gmra.mrb[0].mxu0 %v32
    %v142 = vpop.f32.mrb[0].mxu0
    %v143 = vadd.f32 0.0, %v142
    %v144 = vpop.f32.mrb[0].mxu0
    %145 = vmatprep.mubr.f32.mxu0 0.0
    %146 = vmatmul.mubr.f32.gmra.mrb[0].mxu0 %v33
    %v147 = vpop.f32.mrb[0].mxu0
    %v148 = vadd.f32 0.0, %v147
    %v149 = vpop.f32.mrb[0].mxu0
    %150 = vmatprep.mubr.f32.mxu0 0.0
    %151 = vmatmul.mubr.f32.gmra.mrb[0].mxu0 %v34
    %v152 = vpop.f32.mrb[0].mxu0
    %v153 = vadd.f32 0.0, %v152
    %v154 = vpop.f32.mrb[0].mxu0
    %155 = vmatprep.mubr.f32.mxu0 0.0
    %156 = vmatmul.mubr.f32.gmra.mrb[0].mxu0 %v35
    %v157 = vpop.f32.mrb[0].mxu0
    %v158 = vadd.f32 0.0, %v157
    %v159 = vpop.f32.mrb[0].mxu0
    %160 = vmatprep.mubr.f32.mxu0 0.0
    %161 = vmatmul.mubr.f32.gmra.mrb[0].mxu0 %v36
    %v162 = vpop.f32.mrb[0].mxu0
    %v163 = vadd.f32 0.0, %v162
    %v164 = vpop.f32.mrb[0].mxu0
    %165 = vmatprep.mubr.f32.mxu0 0.0
    %166 = vmatmul.mubr.f32.gmra.mrb[0].mxu0 %v37
    %v167 = vpop.f32.mrb[0].mxu0
    %v168 = vadd.f32 0.0, %v167
    %v169 = vpop.f32.mrb[0].mxu0
    %170 = vmatprep.mubr.f32.mxu0 0.0
    %171 = vmatmul.mubr.f32.gmra.mrb[0].mxu0 %v38
    %v172 = vpop.f32.mrb[0].mxu0
    %v173 = vadd.f32 0.0, %v172
    %v174 = vpop.f32.mrb[0].mxu0
    %175 = vmatprep.mubr.f32.mxu0 0.0
    %176 = vmatmul.mubr.f32.gmra.mrb[0].mxu0 %v39
    %v177 = vpop.f32.mrb[0].mxu0
    %v178 = vadd.f32 0.0, %v177
    %v179 = vpop.f32.mrb[0].mxu0
    %180 = vmatprep.mubr.f32.mxu0 0.0
    %181 = vmatmul.mubr.f32.gmra.mrb[0].mxu0 %v40
    %v182 = vpop.f32.mrb[0].mxu0
    %v183 = vadd.f32 0.0, %v182
    %v184 = vpop.f32.mrb[0].mxu0
    %185 = vmatprep.mubr.f32.mxu0 0.0
    %186 = vmatmul.mubr.f32.gmra.mrb[0].mxu0 %v41
    %v187 = vpop.f32.mrb[0].mxu0
    %v188 = vadd.f32 0.0, %v187
    %v189 = vpop.f32.mrb[0].mxu0
    %190 = vmatprep.mubr.f32.mxu0 0.0
    %191 = vmatmul.mubr.f32.gmra.mrb[0].mxu0 %v42
    %v192 = vpop.f32.mrb[0].mxu0
    %v193 = vadd.f32 0.0, %v192
    %v194 = vpop.f32.mrb[0].mxu0
    %195 = vmatprep.mubr.f32.mxu0 0.0
    %196 = vmatmul.mubr.f32.gmra.mrb[0].mxu0 %v43
    %v197 = vpop.f32.mrb[0].mxu0
    %v198 = vadd.f32 0.0, %v197
    %v199 = vpop.f32.mrb[0].mxu0
    %200 = vmatprep.mubr.f32.mxu0 0.0
    %201 = vmatmul.mubr.f32.gmra.mrb[0].mxu0 %v44
    %v202 = vpop.f32.mrb[0].mxu0
    %v203 = vadd.f32 0.0, %v202
    %v204 = vpop.f32.mrb[0].mxu0
    %205 = vdwg.mxu0
    %v206 = vld [vmem:[%s1] sm:$0xff]
    %v207 = vld [vmem:[%s1 + $0x8] sm:$0xff]
    %v208 = vld [vmem:[%s1 + $0x10] sm:$0xff]
    %v209 = vld [vmem:[%s1 + $0x18] sm:$0xff]
    %v210 = vld [vmem:[%s1 + $0x20] sm:$0xff]
    %v211 = vld [vmem:[%s1 + $0x28] sm:$0xff]
    %v212 = vld [vmem:[%s1 + $0x30] sm:$0xff]
    %v213 = vld [vmem:[%s1 + $0x38] sm:$0xff]
    %v214 = vld [vmem:[%s1 + $0x40] sm:$0xff]
    %v215 = vld [vmem:[%s1 + $0x48] sm:$0xff]
    %v216 = vld [vmem:[%s1 + $0x50] sm:$0xff]
    %v217 = vld [vmem:[%s1 + $0x58] sm:$0xff]
    %v218 = vld [vmem:[%s1 + $0x60] sm:$0xff]
    %v219 = vld [vmem:[%s1 + $0x68] sm:$0xff]
    %v220 = vld [vmem:[%s1 + $0x70] sm:$0xff]
    %v221 = vld [vmem:[%s1 + $0x78] sm:$0xff]
    %223 = vset.pattern.permute.xlu0 0
    %224 = vperm.xlu0 %223, %v206
    %v225 = vpop.permute.xlu0 %224
    %228 = vset.pattern.permute.xlu0 0
    %229 = vperm.xlu0 %228, %v207
    %v230 = vpop.permute.xlu0 %229
    %233 = vset.pattern.permute.xlu0 0
    %234 = vperm.xlu0 %233, %v208
    %v235 = vpop.permute.xlu0 %234
    %238 = vset.pattern.permute.xlu0 0
    %239 = vperm.xlu0 %238, %v209
    %v240 = vpop.permute.xlu0 %239
    %243 = vset.pattern.permute.xlu0 0
    %244 = vperm.xlu0 %243, %v210
    %v245 = vpop.permute.xlu0 %244
    %248 = vset.pattern.permute.xlu0 0
    %249 = vperm.xlu0 %248, %v211
    %v250 = vpop.permute.xlu0 %249
    %253 = vset.pattern.permute.xlu0 0
    %254 = vperm.xlu0 %253, %v212
    %v255 = vpop.permute.xlu0 %254
    %258 = vset.pattern.permute.xlu0 0
    %259 = vperm.xlu0 %258, %v213
    %v260 = vpop.permute.xlu0 %259
    %263 = vset.pattern.permute.xlu0 0
    %264 = vperm.xlu0 %263, %v214
    %v265 = vpop.permute.xlu0 %264
    %268 = vset.pattern.permute.xlu0 0
    %269 = vperm.xlu0 %268, %v215
    %v270 = vpop.permute.xlu0 %269
    %273 = vset.pattern.permute.xlu0 0
    %274 = vperm.xlu0 %273, %v216
    %v275 = vpop.permute.xlu0 %274
    %278 = vset.pattern.permute.xlu0 0
    %279 = vperm.xlu0 %278, %v217
    %v280 = vpop.permute.xlu0 %279
    %283 = vset.pattern.permute.xlu0 0
    %284 = vperm.xlu0 %283, %v218
    %v285 = vpop.permute.xlu0 %284
    %288 = vset.pattern.permute.xlu0 0
    %289 = vperm.xlu0 %288, %v219
    %v290 = vpop.permute.xlu0 %289
    %293 = vset.pattern.permute.xlu0 0
    %294 = vperm.xlu0 %293, %v220
    %v295 = vpop.permute.xlu0 %294
    %298 = vset.pattern.permute.xlu0 0
    %299 = vperm.xlu0 %298, %v221
    %v300 = vpop.permute.xlu0 %299
    %v302 = vmul.f32 %v128, %v225
    %v303 = vmul.f32 %v133, %v230
    %v304 = vmul.f32 %v138, %v235
    %v305 = vmul.f32 %v143, %v240
    %v306 = vmul.f32 %v148, %v245
    %v307 = vmul.f32 %v153, %v250
    %v308 = vmul.f32 %v158, %v255
    %v309 = vmul.f32 %v163, %v260
    %v310 = vmul.f32 %v168, %v265
    %v311 = vmul.f32 %v173, %v270
    %v312 = vmul.f32 %v178, %v275
    %v313 = vmul.f32 %v183, %v280
    %v314 = vmul.f32 %v188, %v285
    %v315 = vmul.f32 %v193, %v290
    %v316 = vmul.f32 %v198, %v295
    %v317 = vmul.f32 %v203, %v300
    %318 = vst [vmem:[#allocation5] sm:$0xff] %v302
    %319 = vst [vmem:[#allocation5 + $0x8] sm:$0xff] %v303
    %320 = vst [vmem:[#allocation5 + $0x10] sm:$0xff] %v304
    %321 = vst [vmem:[#allocation5 + $0x18] sm:$0xff] %v305
    %322 = vst [vmem:[#allocation5 + $0x20] sm:$0xff] %v306
    %323 = vst [vmem:[#allocation5 + $0x28] sm:$0xff] %v307
    %324 = vst [vmem:[#allocation5 + $0x30] sm:$0xff] %v308
    %325 = vst [vmem:[#allocation5 + $0x38] sm:$0xff] %v309
    %326 = vst [vmem:[#allocation5 + $0x40] sm:$0xff] %v310
    %327 = vst [vmem:[#allocation5 + $0x48] sm:$0xff] %v311
    %328 = vst [vmem:[#allocation5 + $0x50] sm:$0xff] %v312
    %329 = vst [vmem:[#allocation5 + $0x58] sm:$0xff] %v313
    %330 = vst [vmem:[#allocation5 + $0x60] sm:$0xff] %v314
    %331 = vst [vmem:[#allocation5 + $0x68] sm:$0xff] %v315
    %332 = vst [vmem:[#allocation5 + $0x70] sm:$0xff] %v316
    %333 = vst [vmem:[#allocation5 + $0x78] sm:$0xff] %v317
    // Predicated region
    $region18: #{tpu_custom_call.1} parent=1 // pred_check
      _
    $region19: #{tpu_custom_call.1} parent=1 // pred_check_branch
      %335 = sbr.rel (0) target = $region21
    $region20: #{tpu_custom_call.1} parent=1 // pred_region
      %s337 = ssub.s32 2048, 2048
      %338 = vsyncadd [#allocation4], %s337
      %s339 = sshll.u32 [#allocation5], 4
      %s340 = int_to_ptr.vmem [resolvable:$true] %s339
      %345 = dma.vmem_to_hbm [thread:$0]  %s340, 2048, %s3, [#allocation4], 128, 128, 8
    $region21: #{tpu_custom_call.1} parent=1 // pred_fallthru
      _
    // Predicated region
    $region22: #{tpu_custom_call.1} parent=1 // pred_check
      _
    $region23: #{tpu_custom_call.1} parent=1 // pred_check_branch
      %347 = sbr.rel (0) target = $region25
    $region24: #{tpu_custom_call.1} parent=1 // pred_region
      %348 = dma.done [#allocation4], 2048
    $region25: #{tpu_custom_call.1} parent=1 // pred_fallthru
      _
    %349 = vsyncpa [#allocation3], 1
    %350 = vsyncpa [#allocation4], 1

</llo_original>
